<compile_context>
chip_gen: v5e
topology: v5e:2x2
jax: 0.10.0
libtpu: 0.0.40
codegen_flags: <defaults>
</compile_context>

<pallas_src>
import jax
import jax.numpy as jnp
from jax.experimental import pallas as pl
from jax.experimental.pallas import tpu as pltpu

# De-regularization constants (Frenet frame bounds).
X_MAX, X_MIN = 80.0, 0.0
Y_MAX, Y_MIN = 6.0, -6.0
OPTION_ID = 3  # reference hard-codes option = torch.full((B,), 3)


def planner_kernel(data_ref, w1_ref, b1_ref, w2_ref, b2_ref,
                   wxy_ref, bxy_ref, scale_ref, offset_ref, out_ref):
    # ---- Feature_model: 2-layer MLP with ReLU (bf16 MXU operands, f32 accumulate) ----
    x = data_ref[...]                                        # (TB, D_in) bf16
    h1 = jnp.maximum(
        jnp.dot(x, w1_ref[...], preferred_element_type=jnp.float32) + b1_ref[...],
        0.0)
    feat = jnp.maximum(
        jnp.dot(h1.astype(jnp.bfloat16), w2_ref[...],
                preferred_element_type=jnp.float32) + b2_ref[...],
        0.0)

    # ---- Fused actor head: one (hidden, 2T) matmul covers both X and Y ----
    # Option-dependent terms (per-option weight row + noise-library row) were
    # folded into bxy at parameter-prep time because option == 3 is constant.
    pre = (jnp.dot(feat.astype(jnp.bfloat16), wxy_ref[...],
                   preferred_element_type=jnp.float32) + bxy_ref[...])

    # sigmoid -> de_regularize(norm, MAX, MIN) = norm * (MAX - MIN) + MIN,
    # done once on the fused (TB, 2T) tile (lane-dense single store).
    out_ref[...] = jax.nn.sigmoid(pre) * scale_ref[...] + offset_ref[...]


def hifren_planner_forward(data, last_option, params):
    """data: (B, D_in) f32; last_option: (B,) int -> (traj (B, T, 2), option (B,))."""
    # last_option only feeds the option head, whose result the reference discards
    # (option is overwritten with the constant 3), so it never reaches the kernel.
    del last_option
    B, d_in = data.shape
    T = params["bax"].shape[1]

    # ---- parameter prep (tiny O(hidden*T) glue; constant-folds under jit) ----
    w1 = params["w1"].astype(jnp.bfloat16)
    w2 = params["w2"].astype(jnp.bfloat16)
    w_xy = jnp.concatenate([params["waxf"], params["wayf"]], axis=1).astype(jnp.bfloat16)
    # Fold bias + per-option weight row (option==3) + noise-library row into one bias.
    b_xy = jnp.concatenate(
        [params["bax"] + params["waxo"][OPTION_ID:OPTION_ID + 1]
         + params["noise_x"][OPTION_ID:OPTION_ID + 1],
         params["bay"] + params["wayo"][OPTION_ID:OPTION_ID + 1]
         + params["noise_y"][OPTION_ID:OPTION_ID + 1]],
        axis=1)                                                       # (1, 2T) f32
    scale = jnp.concatenate(
        [jnp.full((1, T), X_MAX - X_MIN, jnp.float32),
         jnp.full((1, T), Y_MAX - Y_MIN, jnp.float32)], axis=1)       # (1, 2T)
    offset = jnp.concatenate(
        [jnp.full((1, T), X_MIN, jnp.float32),
         jnp.full((1, T), Y_MIN, jnp.float32)], axis=1)               # (1, 2T)
    b1, b2 = params["b1"], params["b2"]
    data_bf = data.astype(jnp.bfloat16)

    # ---- batch grid: tile rows, keep weights resident across the grid ----
    # TB sized so 2x double-buffered data tile + 2x output tile + weights fit
    # comfortably under the v7x scoped-VMEM budget.
    TB = B if B <= 1024 else 1024
    grid = (pl.cdiv(B, TB),)

    def rows(i):
        return (i, 0)

    def fixed(i):
        return (0, 0)

    out = pl.pallas_call(
        planner_kernel,
        out_shape=jax.ShapeDtypeStruct((B, 2 * T), jnp.float32),
        grid=grid,
        in_specs=[
            pl.BlockSpec((TB, d_in), rows),      # data tiles stream over the grid
            pl.BlockSpec(w1.shape, fixed),       # weights/biases: same block every step
            pl.BlockSpec(b1.shape, fixed),
            pl.BlockSpec(w2.shape, fixed),
            pl.BlockSpec(b2.shape, fixed),
            pl.BlockSpec(w_xy.shape, fixed),
            pl.BlockSpec(b_xy.shape, fixed),
            pl.BlockSpec(scale.shape, fixed),
            pl.BlockSpec(offset.shape, fixed),
        ],
        out_specs=pl.BlockSpec((TB, 2 * T), rows),
        compiler_params=pltpu.CompilerParams(
            dimension_semantics=("parallel",)),
    )(data_bf, w1, b1, w2, b2, w_xy, b_xy, scale, offset)

    # torch.stack([Frent_X, Frent_Y], dim=2) -> (B, T, 2)   (glue, not hot path)
    frenet_trajectory = jnp.stack([out[:, :T], out[:, T:]], axis=2)
    # option is a compile-time constant in the reference; produced in the wrapper.
    option = jnp.full((B,), OPTION_ID, dtype=jnp.int32)
    return frenet_trajectory, option


def init_params(key, d_in, hidden, num_options, horizon):
    ks = jax.random.split(key, 10)
    s = 0.1
    params = {
        # Feature_model
        "w1": s * jax.random.normal(ks[0], (d_in, hidden), jnp.float32),
        "b1": jnp.zeros((1, hidden), jnp.float32),
        "w2": s * jax.random.normal(ks[1], (hidden, hidden), jnp.float32),
        "b2": jnp.zeros((1, hidden), jnp.float32),
        # option_model params kept for checkpoint-compat; unused (dead code in reference)
        "wof": s * jax.random.normal(ks[2], (hidden, num_options), jnp.float32),
        "woo": s * jax.random.normal(ks[3], (num_options, num_options), jnp.float32),
        "bo": jnp.zeros((1, num_options), jnp.float32),
        # actor_model X head
        "waxf": s * jax.random.normal(ks[4], (hidden, horizon), jnp.float32),
        "waxo": s * jax.random.normal(ks[5], (num_options, horizon), jnp.float32),
        "bax": jnp.zeros((1, horizon), jnp.float32),
        # actor_model Y head
        "wayf": s * jax.random.normal(ks[6], (hidden, horizon), jnp.float32),
        "wayo": s * jax.random.normal(ks[7], (num_options, horizon), jnp.float32),
        "bay": jnp.zeros((1, horizon), jnp.float32),
    }
    # TODO(synk): noise_lib_X / noise_lib_Y are loaded from JSON files in the
    # original; synthesized here as deterministic per-option trajectory priors.
    opt_idx = jnp.arange(num_options, dtype=jnp.float32)[:, None]
    t_idx = jnp.arange(horizon, dtype=jnp.float32)[None, :]
    params["noise_x"] = 0.05 * jnp.sin(0.5 * (opt_idx + 1.0) * t_idx)
    params["noise_y"] = 0.05 * jnp.cos(0.3 * (opt_idx + 1.0) * t_idx)
    return params


if __name__ == "__main__":
    B, D_IN, HIDDEN, NUM_OPTIONS, HORIZON = 2, 64, 32, 8, 16

    key = jax.random.PRNGKey(0)
    k_data, k_params = jax.random.split(key)
    data = jax.random.normal(k_data, (B, D_IN), jnp.float32)
    last_option = jnp.array([0, 1], dtype=jnp.int32)
    params = init_params(k_params, D_IN, HIDDEN, NUM_OPTIONS, HORIZON)

    traj, option = hifren_planner_forward(data, last_option, params)
    jax.block_until_ready((traj, option))

    assert traj.shape == (B, HORIZON, 2)
    assert option.shape == (B,)
    assert bool(jnp.all(option == 3))
    # Sanity: outputs live inside the de-regularized Frenet bounds.
    assert bool(jnp.all((traj[:, :, 0] >= X_MIN) & (traj[:, :, 0] <= X_MAX)))
    assert bool(jnp.all((traj[:, :, 1] >= Y_MIN) & (traj[:, :, 1] <= Y_MAX)))
    print("KERNEL_OK")
</pallas_src>

<mosaic_0001>
module attributes {stable_mosaic.version = 11 : i64} {
  func.func @planner_kernel(%arg0: i32, %arg1: memref<2x64xbf16, #tpu.memory_space<vmem>>, %arg2: memref<64x32xbf16, #tpu.memory_space<vmem>>, %arg3: memref<1x32xf32, #tpu.memory_space<vmem>>, %arg4: memref<32x32xbf16, #tpu.memory_space<vmem>>, %arg5: memref<1x32xf32, #tpu.memory_space<vmem>>, %arg6: memref<32x32xbf16, #tpu.memory_space<vmem>>, %arg7: memref<1x32xf32, #tpu.memory_space<vmem>>, %arg8: memref<1x32xf32, #tpu.memory_space<vmem>>, %arg9: memref<1x32xf32, #tpu.memory_space<vmem>>, %arg10: memref<2x32xf32, #tpu.memory_space<vmem>>) attributes {dimension_semantics = [#tpu.dimension_semantics<parallel>], iteration_bounds = array<i64: 1>, scalar_prefetch = 0 : i64, scratch_operands = 0 : i64, tpu.core_type = #tpu.core_type<tc>, window_params = [{transform_indices = @transform_0, window_bounds = array<i64: 2, 64>}, {pipeline_mode = #tpu.pipeline_mode<synchronous>, transform_indices = @transform_1, window_bounds = array<i64: 64, 32>}, {pipeline_mode = #tpu.pipeline_mode<synchronous>, transform_indices = @transform_2, window_bounds = array<i64: 1, 32>}, {pipeline_mode = #tpu.pipeline_mode<synchronous>, transform_indices = @transform_3, window_bounds = array<i64: 32, 32>}, {pipeline_mode = #tpu.pipeline_mode<synchronous>, transform_indices = @transform_4, window_bounds = array<i64: 1, 32>}, {pipeline_mode = #tpu.pipeline_mode<synchronous>, transform_indices = @transform_5, window_bounds = array<i64: 32, 32>}, {pipeline_mode = #tpu.pipeline_mode<synchronous>, transform_indices = @transform_6, window_bounds = array<i64: 1, 32>}, {pipeline_mode = #tpu.pipeline_mode<synchronous>, transform_indices = @transform_7, window_bounds = array<i64: 1, 32>}, {pipeline_mode = #tpu.pipeline_mode<synchronous>, transform_indices = @transform_8, window_bounds = array<i64: 1, 32>}, {transform_indices = @transform_9, window_bounds = array<i64: 2, 32>}]} {
    %c0 = arith.constant 0 : index
    %c0_0 = arith.constant 0 : index
    %0 = vector.load %arg1[%c0, %c0_0] : memref<2x64xbf16, #tpu.memory_space<vmem>>, vector<2x64xbf16>
    %c0_1 = arith.constant 0 : index
    %c0_2 = arith.constant 0 : index
    %1 = vector.load %arg2[%c0_1, %c0_2] : memref<64x32xbf16, #tpu.memory_space<vmem>>, vector<64x32xbf16>
    %cst = arith.constant dense<0.000000e+00> : vector<2x32xf32>
    %2 = tpu.matmul %0, %1, %cst {dimension_numbers = #tpu.dot_dimension_numbers<[1], [0], [0], [1], [0, 0, 1, 1], [], []>} : vector<2x64xbf16>, vector<64x32xbf16>, vector<2x32xf32> -> vector<2x32xf32>
    %c0_3 = arith.constant 0 : index
    %c0_4 = arith.constant 0 : index
    %3 = vector.load %arg3[%c0_3, %c0_4] : memref<1x32xf32, #tpu.memory_space<vmem>>, vector<1x32xf32>
    %4 = vector.broadcast %3 : vector<1x32xf32> to vector<2x32xf32>
    %5 = arith.addf %2, %4 : vector<2x32xf32>
    %cst_5 = arith.constant 0.000000e+00 : f32
    %6 = vector.broadcast %cst_5 : f32 to vector<2x32xf32>
    %7 = arith.maximumf %5, %6 : vector<2x32xf32>
    %8 = arith.truncf %7 : vector<2x32xf32> to vector<2x32xbf16>
    %c0_6 = arith.constant 0 : index
    %c0_7 = arith.constant 0 : index
    %9 = vector.load %arg4[%c0_6, %c0_7] : memref<32x32xbf16, #tpu.memory_space<vmem>>, vector<32x32xbf16>
    %cst_8 = arith.constant dense<0.000000e+00> : vector<2x32xf32>
    %10 = tpu.matmul %8, %9, %cst_8 {dimension_numbers = #tpu.dot_dimension_numbers<[1], [0], [0], [1], [0, 0, 1, 1], [], []>} : vector<2x32xbf16>, vector<32x32xbf16>, vector<2x32xf32> -> vector<2x32xf32>
    %c0_9 = arith.constant 0 : index
    %c0_10 = arith.constant 0 : index
    %11 = vector.load %arg5[%c0_9, %c0_10] : memref<1x32xf32, #tpu.memory_space<vmem>>, vector<1x32xf32>
    %12 = vector.broadcast %11 : vector<1x32xf32> to vector<2x32xf32>
    %13 = arith.addf %10, %12 : vector<2x32xf32>
    %cst_11 = arith.constant 0.000000e+00 : f32
    %14 = vector.broadcast %cst_11 : f32 to vector<2x32xf32>
    %15 = arith.maximumf %13, %14 : vector<2x32xf32>
    %16 = arith.truncf %15 : vector<2x32xf32> to vector<2x32xbf16>
    %c0_12 = arith.constant 0 : index
    %c0_13 = arith.constant 0 : index
    %17 = vector.load %arg6[%c0_12, %c0_13] : memref<32x32xbf16, #tpu.memory_space<vmem>>, vector<32x32xbf16>
    %cst_14 = arith.constant dense<0.000000e+00> : vector<2x32xf32>
    %18 = tpu.matmul %16, %17, %cst_14 {dimension_numbers = #tpu.dot_dimension_numbers<[1], [0], [0], [1], [0, 0, 1, 1], [], []>} : vector<2x32xbf16>, vector<32x32xbf16>, vector<2x32xf32> -> vector<2x32xf32>
    %c0_15 = arith.constant 0 : index
    %c0_16 = arith.constant 0 : index
    %19 = vector.load %arg7[%c0_15, %c0_16] : memref<1x32xf32, #tpu.memory_space<vmem>>, vector<1x32xf32>
    %20 = vector.broadcast %19 : vector<1x32xf32> to vector<2x32xf32>
    %21 = arith.addf %18, %20 : vector<2x32xf32>
    %22 = arith.negf %21 : vector<2x32xf32>
    %23 = math.exp %22 : vector<2x32xf32>
    %cst_17 = arith.constant 1.000000e+00 : f32
    %24 = vector.broadcast %cst_17 : f32 to vector<2x32xf32>
    %25 = arith.addf %24, %23 : vector<2x32xf32>
    %26 = arith.divf %24, %25 : vector<2x32xf32>
    %c0_18 = arith.constant 0 : index
    %c0_19 = arith.constant 0 : index
    %27 = vector.load %arg8[%c0_18, %c0_19] : memref<1x32xf32, #tpu.memory_space<vmem>>, vector<1x32xf32>
    %28 = vector.broadcast %27 : vector<1x32xf32> to vector<2x32xf32>
    %29 = arith.mulf %26, %28 : vector<2x32xf32>
    %c0_20 = arith.constant 0 : index
    %c0_21 = arith.constant 0 : index
    %30 = vector.load %arg9[%c0_20, %c0_21] : memref<1x32xf32, #tpu.memory_space<vmem>>, vector<1x32xf32>
    %31 = vector.broadcast %30 : vector<1x32xf32> to vector<2x32xf32>
    %32 = arith.addf %29, %31 : vector<2x32xf32>
    %c0_22 = arith.constant 0 : index
    %c0_23 = arith.constant 0 : index
    %33 = vector.load %arg10[%c0_22, %c0_23] : memref<2x32xf32, #tpu.memory_space<vmem>>, vector<2x32xf32>
    tpu.vector_store %arg10[%c0_22, %c0_23], %32 {strides = array<i32>} : memref<2x32xf32, #tpu.memory_space<vmem>>, vector<2x32xf32>,
    return
  }
  func.func @transform_0(%arg0: i32) -> (i32, i32) {
    %c0_i32 = arith.constant 0 : i32
    %c0_i32_0 = arith.constant 0 : i32
    return %arg0, %c0_i32 : i32, i32
  }
  func.func @transform_1(%arg0: i32) -> (i32, i32) {
    %c0_i32 = arith.constant 0 : i32
    %c0_i32_0 = arith.constant 0 : i32
    %c0_i32_1 = arith.constant 0 : i32
    return %c0_i32, %c0_i32_0 : i32, i32
  }
  func.func @transform_2(%arg0: i32) -> (i32, i32) {
    %c0_i32 = arith.constant 0 : i32
    %c0_i32_0 = arith.constant 0 : i32
    %c0_i32_1 = arith.constant 0 : i32
    return %c0_i32, %c0_i32_0 : i32, i32
  }
  func.func @transform_3(%arg0: i32) -> (i32, i32) {
    %c0_i32 = arith.constant 0 : i32
    %c0_i32_0 = arith.constant 0 : i32
    %c0_i32_1 = arith.constant 0 : i32
    return %c0_i32, %c0_i32_0 : i32, i32
  }
  func.func @transform_4(%arg0: i32) -> (i32, i32) {
    %c0_i32 = arith.constant 0 : i32
    %c0_i32_0 = arith.constant 0 : i32
    %c0_i32_1 = arith.constant 0 : i32
    return %c0_i32, %c0_i32_0 : i32, i32
  }
  func.func @transform_5(%arg0: i32) -> (i32, i32) {
    %c0_i32 = arith.constant 0 : i32
    %c0_i32_0 = arith.constant 0 : i32
    %c0_i32_1 = arith.constant 0 : i32
    return %c0_i32, %c0_i32_0 : i32, i32
  }
  func.func @transform_6(%arg0: i32) -> (i32, i32) {
    %c0_i32 = arith.constant 0 : i32
    %c0_i32_0 = arith.constant 0 : i32
    %c0_i32_1 = arith.constant 0 : i32
    return %c0_i32, %c0_i32_0 : i32, i32
  }
  func.func @transform_7(%arg0: i32) -> (i32, i32) {
    %c0_i32 = arith.constant 0 : i32
    %c0_i32_0 = arith.constant 0 : i32
    %c0_i32_1 = arith.constant 0 : i32
    return %c0_i32, %c0_i32_0 : i32, i32
  }
  func.func @transform_8(%arg0: i32) -> (i32, i32) {
    %c0_i32 = arith.constant 0 : i32
    %c0_i32_0 = arith.constant 0 : i32
    %c0_i32_1 = arith.constant 0 : i32
    return %c0_i32, %c0_i32_0 : i32, i32
  }
  func.func @transform_9(%arg0: i32) -> (i32, i32) {
    %c0_i32 = arith.constant 0 : i32
    %c0_i32_0 = arith.constant 0 : i32
    return %arg0, %c0_i32 : i32, i32
  }
}

</mosaic_0001>

<llo_original>
// kernel: tpu_custom_call.1
$region0: #{tpu_custom_call.1}
  #allocation0 [shape = 'u32[]', space=smem, size = 0x4, offset = 0x4, fixed_abs, tag = 'smem constant byte address 0x4 - core index']
  #allocation1 [shape = 'u32[72,128]{1,0:T(1,128)}', space=vmem, size = 0x9000, scoped, tag = 'internal scratch']
  %s0 = inlined_call_operand.vmem [shape: bf16[2,64], index: 0, kind: input, shape index: {}]
  %s1 = inlined_call_operand.vmem [shape: bf16[64,32], index: 1, kind: input, shape index: {}]
  %s2 = inlined_call_operand.vmem [shape: f32[1,32], index: 2, kind: input, shape index: {}]
  %s3 = inlined_call_operand.vmem [shape: bf16[32,32], index: 3, kind: input, shape index: {}]
  %s4 = inlined_call_operand.vmem [shape: f32[1,32], index: 4, kind: input, shape index: {}]
  %s5 = inlined_call_operand.vmem [shape: bf16[32,32], index: 5, kind: input, shape index: {}]
  %s6 = inlined_call_operand.vmem [shape: f32[1,32], index: 6, kind: input, shape index: {}]
  %s7 = inlined_call_operand.vmem [shape: f32[1,32], index: 7, kind: input, shape index: {}]
  %s8 = inlined_call_operand.vmem [shape: f32[1,32], index: 8, kind: input, shape index: {}]
  %s9 = inlined_call_operand.hbm [shape: f32[2,32], index: 9, kind: output, shape index: {}]
  %s10 = sld [smem:[#allocation0]]
  $region46: #{tpu_custom_call.1} parent=0
    _
  %s12 = ssub.s32 1, %s10
  %s13 = scalar_select 0, %s12, %s10
  $region1: #{tpu_custom_call.1} parent=0
    #allocation2 [shape = 'u8[1024]{0}', space=vmem, size = 0x400, scoped, tag = 'output window, operand 0, single buffered']
    #allocation3 [shape = 's32[1]{0}', space=sflag, size = 0x4, scoped, tag = 'scoped memory for tpu_custom_call.1']
    %14 = vsyncpa [#allocation3], 0
    // Predicated region
    $region2: #{tpu_custom_call.1} parent=1 // pred_check
      _
    $region3: #{tpu_custom_call.1} parent=1 // pred_check_branch
      %16 = sbr.rel (0) target = $region5
    $region4: #{tpu_custom_call.1} parent=1 // pred_region
      _
    $region5: #{tpu_custom_call.1} parent=1 // pred_fallthru
      _
    // Predicated region
    $region6: #{tpu_custom_call.1} parent=1 // pred_check
      _
    $region7: #{tpu_custom_call.1} parent=1 // pred_check_branch
      %18 = sbr.rel (0) target = $region9
    $region8: #{tpu_custom_call.1} parent=1 // pred_region
      _
    $region9: #{tpu_custom_call.1} parent=1 // pred_fallthru
      _
    // Predicated region
    $region10: #{tpu_custom_call.1} parent=1 // pred_check
      _
    $region11: #{tpu_custom_call.1} parent=1 // pred_check_branch
      %20 = sbr.rel (0) target = $region13
    $region12: #{tpu_custom_call.1} parent=1 // pred_region
      _
    $region13: #{tpu_custom_call.1} parent=1 // pred_fallthru
      _
    // Predicated region
    $region14: #{tpu_custom_call.1} parent=1 // pred_check
      _
    $region15: #{tpu_custom_call.1} parent=1 // pred_check_branch
      %22 = sbr.rel (0) target = $region17
    $region16: #{tpu_custom_call.1} parent=1 // pred_region
      _
    $region17: #{tpu_custom_call.1} parent=1 // pred_fallthru
      _
    // Predicated region
    $region18: #{tpu_custom_call.1} parent=1 // pred_check
      _
    $region19: #{tpu_custom_call.1} parent=1 // pred_check_branch
      %24 = sbr.rel (0) target = $region21
    $region20: #{tpu_custom_call.1} parent=1 // pred_region
      _
    $region21: #{tpu_custom_call.1} parent=1 // pred_fallthru
      _
    // Predicated region
    $region22: #{tpu_custom_call.1} parent=1 // pred_check
      _
    $region23: #{tpu_custom_call.1} parent=1 // pred_check_branch
      %26 = sbr.rel (0) target = $region25
    $region24: #{tpu_custom_call.1} parent=1 // pred_region
      _
    $region25: #{tpu_custom_call.1} parent=1 // pred_fallthru
      _
    // Predicated region
    $region26: #{tpu_custom_call.1} parent=1 // pred_check
      _
    $region27: #{tpu_custom_call.1} parent=1 // pred_check_branch
      %28 = sbr.rel (0) target = $region29
    $region28: #{tpu_custom_call.1} parent=1 // pred_region
      _
    $region29: #{tpu_custom_call.1} parent=1 // pred_fallthru
      _
    // Predicated region
    $region30: #{tpu_custom_call.1} parent=1 // pred_check
      _
    $region31: #{tpu_custom_call.1} parent=1 // pred_check_branch
      %30 = sbr.rel (0) target = $region33
    $region32: #{tpu_custom_call.1} parent=1 // pred_region
      _
    $region33: #{tpu_custom_call.1} parent=1 // pred_fallthru
      _
    // Predicated region
    $region34: #{tpu_custom_call.1} parent=1 // pred_check
      _
    $region35: #{tpu_custom_call.1} parent=1 // pred_check_branch
      %32 = sbr.rel (0) target = $region37
    $region36: #{tpu_custom_call.1} parent=1 // pred_region
      _
    $region37: #{tpu_custom_call.1} parent=1 // pred_fallthru
      _
    %v34 = vld [vmem:[%s0] sm:$0x1]
    %v35 = vld [vmem:[%s1] sm:$0xf]
    %v36 = vld [vmem:[%s1 + $0x4] sm:$0xf]
    %v37 = vld [vmem:[%s1 + $0x8] sm:$0xf]
    %v38 = vld [vmem:[%s1 + $0xc] sm:$0xf]
    %v39 = vld [vmem:[%s1 + $0x10] sm:$0xf]
    %v40 = vld [vmem:[%s1 + $0x14] sm:$0xf]
    %v41 = vld [vmem:[%s1 + $0x18] sm:$0xf]
    %v42 = vld [vmem:[%s1 + $0x1c] sm:$0xf]
    %v43 = vld [vmem:[%s2] sm:$0x1]
    %v45 = vperm.slane %v43, 0
    %v55 = vunpack.c.l.b16 %v35
    %v56 = vunpack.c.l.b16 %v36
    %v57 = vunpack.c.l.b16 %v37
    %v58 = vunpack.c.l.b16 %v38
    %v59 = vunpack.c.l.b16 %v39
    %v60 = vunpack.c.l.b16 %v40
    %v61 = vunpack.c.l.b16 %v41
    %v62 = vunpack.c.l.b16 %v42
    %v63 = vpack.c.b16 %v56, %v55
    %v64 = vpack.c.b16 %v58, %v57
    %v65 = vpack.c.b16 %v60, %v59
    %v66 = vpack.c.b16 %v62, %v61
    %vm71 = vcmask 523264
    %v73 = vsel %vm71, %v34, 0
    %75 = vmatpush.bf16.msra.mxu0 0
    %76 = vmatpush.bf16.msra.mxu0 0
    %77 = vmatpush.bf16.msra.mxu0 0
    %78 = vmatpush.bf16.msra.mxu0 0
    %79 = vmatpush.bf16.msra.mxu0 %v66
    %80 = vmatpush.bf16.msra.mxu0 %v65
    %81 = vmatpush.bf16.msra.mxu0 %v64
    %82 = vmatpush.bf16.msra.mxu0 %v63
    %83 = vmatmul.bf16.gmra.mxu0 %v73
    %v84 = vpop.f32.mrf.mxu0
    %v85 = vadd.f32 %v45, %v84
    %v86 = vpop.f32.mrf.mxu0
    %87 = vdwg.mxu0
    %v88 = vmax.f32 %v85, 0.0
    %v89 = vpack.c.bf16 %v88, %v88
    %v90 = vld [vmem:[%s3] sm:$0xf]
    %v91 = vld [vmem:[%s3 + $0x4] sm:$0xf]
    %v92 = vld [vmem:[%s3 + $0x8] sm:$0xf]
    %v93 = vld [vmem:[%s3 + $0xc] sm:$0xf]
    %v94 = vld [vmem:[%s4] sm:$0x1]
    %v96 = vperm.slane %v94, 0
    %v102 = vunpack.c.l.b16 %v90
    %v103 = vunpack.c.l.b16 %v91
    %v104 = vunpack.c.l.b16 %v92
    %v105 = vunpack.c.l.b16 %v93
    %v106 = vpack.c.b16 %v103, %v102
    %v107 = vpack.c.b16 %v105, %v104
    %vm110 = vcmask 261120
    %v112 = vsel %vm110, %v89, 0
    %114 = vmatpush.bf16.msra.mxu0 0
    %115 = vmatpush.bf16.msra.mxu0 0
    %116 = vmatpush.bf16.msra.mxu0 0
    %117 = vmatpush.bf16.msra.mxu0 0
    %118 = vmatpush.bf16.msra.mxu0 0
    %119 = vmatpush.bf16.msra.mxu0 0
    %120 = vmatpush.bf16.msra.mxu0 %v107
    %121 = vmatpush.bf16.msra.mxu0 %v106
    %122 = vmatmul.bf16.gmra.mxu0 %v112
    %v123 = vpop.f32.mrf.mxu0
    %v124 = vadd.f32 %v96, %v123
    %v125 = vpop.f32.mrf.mxu0
    %126 = vdwg.mxu0
    %v127 = vmax.f32 %v124, 0.0
    %v128 = vpack.c.bf16 %v127, %v127
    %v129 = vld [vmem:[%s5] sm:$0xf]
    %v130 = vld [vmem:[%s5 + $0x4] sm:$0xf]
    %v131 = vld [vmem:[%s5 + $0x8] sm:$0xf]
    %v132 = vld [vmem:[%s5 + $0xc] sm:$0xf]
    %v133 = vld [vmem:[%s6] sm:$0x1]
    %v135 = vperm.slane %v133, 0
    %v141 = vunpack.c.l.b16 %v129
    %v142 = vunpack.c.l.b16 %v130
    %v143 = vunpack.c.l.b16 %v131
    %v144 = vunpack.c.l.b16 %v132
    %v145 = vpack.c.b16 %v142, %v141
    %v146 = vpack.c.b16 %v144, %v143
    %v150 = vsel %vm110, %v128, 0
    %152 = vmatpush.bf16.msra.mxu0 0
    %153 = vmatpush.bf16.msra.mxu0 0
    %154 = vmatpush.bf16.msra.mxu0 0
    %155 = vmatpush.bf16.msra.mxu0 0
    %156 = vmatpush.bf16.msra.mxu0 0
    %157 = vmatpush.bf16.msra.mxu0 0
    %158 = vmatpush.bf16.msra.mxu0 %v146
    %159 = vmatpush.bf16.msra.mxu0 %v145
    %160 = vmatmul.bf16.gmra.mxu0 %v150
    %v161 = vpop.f32.mrf.mxu0
    %v162 = vadd.f32 %v135, %v161
    %v163 = vpop.f32.mrf.mxu0
    %164 = vdwg.mxu0
    %v165 = vxor.u32 %v162, 2147483648
    %v166 = vmul.f32 %v165, 1.442695
    %v167 = vpow.pop %v166
    %v168 = vadd.f32 %v167, 1.0
    %v169 = vrcp.pop %v168
    %v170 = vmul.f32 %v168, %v169
    %v171 = vsub.f32 1.0, %v170
    %v172 = vmul.f32 %v169, %v171
    %v173 = vadd.f32 %v169, %v172
    %vm174 = vweird.f32 %v168
    %vm175 = vweird.f32 %v169
    %vm176 = vmor %vm174, %vm175
    %v177 = vsel %vm176, %v169, %v173
    %v178 = vand.u32 2147483647, %v168
    %vm179 = vcmp.eq.f32.partialorder %v178, 8.507059e+37
    %v180 = vand.u32 %v168, 2147483648
    %v181 = vor.u32 1.1754944e-38, %v180
    %v182 = vsel %vm179, %v181, %v177
    %v183 = vmul.f32 1.0, %v182
    %v184 = vld [vmem:[%s7] sm:$0x1]
    %v186 = vperm.slane %v184, 0
    %v188 = vmul.f32 %v183, %v186
    %v189 = vld [vmem:[%s8] sm:$0x1]
    %v191 = vperm.slane %v189, 0
    %v193 = vadd.f32 %v188, %v191
    %vm194 = vcmask 254976
    %195 = vst.msk [vmem:[#allocation2] sm:$0x3] %vm194, %v193
    // Predicated region
    $region38: #{tpu_custom_call.1} parent=1 // pred_check
      _
    $region39: #{tpu_custom_call.1} parent=1 // pred_check_branch
      %197 = sbr.rel (0) target = $region41
    $region40: #{tpu_custom_call.1} parent=1 // pred_region
      %199 = vsyncadd [#allocation3], 0
      %s201 = sshll.u32 [#allocation2], 4
      %s202 = int_to_ptr.vmem [resolvable:$true] %s201
      %s203 = sshll.u32 %s9, 4
      %s204 = int_to_ptr.hbm [resolvable:$true] %s203
      %206 = dma.vmem_to_hbm [thread:$0]  %s202, 32, %s204, [#allocation3]
    $region41: #{tpu_custom_call.1} parent=1 // pred_fallthru
      _
    // Predicated region
    $region42: #{tpu_custom_call.1} parent=1 // pred_check
      _
    $region43: #{tpu_custom_call.1} parent=1 // pred_check_branch
      %208 = sbr.rel (0) target = $region45
    $region44: #{tpu_custom_call.1} parent=1 // pred_region
      %210 = dma.done [#allocation3], 32
    $region45: #{tpu_custom_call.1} parent=1 // pred_fallthru
      _
    %211 = vsyncpa [#allocation3], 1

</llo_original>
